<compile_context>
chip_gen: v6e
topology: v6e:2x2x1
jax: 0.10.0
libtpu: 0.0.40
codegen_flags: <defaults>
</compile_context>

<pallas_src>
import functools

import jax
import jax.numpy as jnp
import numpy as np
from jax.experimental import pallas as pl
from jax.experimental.pallas import tpu as pltpu

_ISSUE_UNROLL = 8   # row-gather DMA starts issued per inner-loop iteration


def _round_up(x, m):
    return ((x + m - 1) // m) * m


def _lora_embed_kernel(ids_ref,      # SMEM (n_pad,) int32 — scalar prefetch
                       w_base_hbm,   # ANY  (V, D)   — stays in HBM, row-gathered
                       a_ref,        # VMEM (tn, r)  — pre-gathered LoRA-A rows
                       w_b_ref,      # VMEM (r, D)   — scaled B, resident
                       out_ref,      # VMEM (tn, D)  — output block for this tile
                       base_buf,     # VMEM (2*tn, D)— double-buffered gathered rows
                       sems,         # DMA semaphores, shape (2,) — one per slot
                       *, tn, n_tiles):
    """One grid step = one token tile of `tn` rows.

    Step t: (a) prime tile 0's gather at t == 0, (b) issue tile t+1's gather
    into the other slot, (c) single bulk wait on tile t's slot, (d) LoRA matmul
    + base add + lane-dense store.
    """
    t = pl.program_id(0)

    def issue_tile(tile_idx, slot):
        tok0 = tile_idx * tn
        row0 = slot * tn

        @pl.loop(0, tn // _ISSUE_UNROLL)
        def _issue(c):
            j0 = c * _ISSUE_UNROLL
            for u in range(_ISSUE_UNROLL):     # static unroll of descriptor pushes
                j = j0 + u
                tok = ids_ref[tok0 + j]
                pltpu.make_async_copy(
                    w_base_hbm.at[pl.ds(tok, 1), :],
                    base_buf.at[pl.ds(row0 + j, 1), :],
                    sems.at[slot],
                ).start()

    # Prime: first grid step issues its own tile's gather.
    @pl.when(t == 0)
    def _prime():
        issue_tile(0, 0)

    # Prefetch: issue tile t+1's gather into the other slot before draining
    # tile t, so next tile's HBM reads overlap this tile's wait/compute/store.
    @pl.when(t + 1 < n_tiles)
    def _prefetch_next():
        issue_tile(t + 1, (t + 1) % 2)

    # Bulk drain of this tile's tn row copies: DMA semaphores count bytes, so a
    # single wait whose dst covers the whole (tn, D) slot accounts for all tn
    # row copies.  (The src slice is irrelevant for the wait; shapes must match.)
    slot = t % 2
    off = pl.multiple_of(slot * tn, 8)
    pltpu.make_async_copy(
        w_base_hbm.at[pl.ds(0, tn), :],
        base_buf.at[pl.ds(off, tn), :],
        sems.at[slot],
    ).wait()

    # LoRA path: (tn, r) @ (r, D) in native dtype on the MXU (scaling already
    # folded into w_b), accumulate in f32, add the gathered base rows, store.
    lora = jnp.dot(a_ref[...], w_b_ref[...], preferred_element_type=jnp.float32)
    base = base_buf[pl.ds(off, tn), :]
    out_ref[...] = (base.astype(jnp.float32) + lora).astype(out_ref.dtype)


def lora_transposed_embedding_forward(ids, w_base, w_a, w_b, scaling,
                                      *, token_tile=512):
    """ids: [B, S] int; w_base: [V, D]; w_a: [V, r]; w_b: [r, D] -> [B, S, D]."""
    B, S = ids.shape
    V, D = w_base.shape
    r = w_a.shape[1]
    assert w_a.shape == (V, r) and w_b.shape == (r, D)
    assert r >= 1
    assert D % 128 == 0, "embedding dim must be a multiple of 128 (lane-dense)"

    itemsize = jnp.dtype(w_base.dtype).itemsize
    sub = 8 * max(1, 4 // itemsize)            # f32 -> 8, bf16 -> 16, int8 -> 32
    assert token_tile % sub == 0 and token_tile % _ISSUE_UNROLL == 0

    N = B * S
    tn = min(token_tile, _round_up(N, sub))    # sublane-aligned token tile
    # Keep tn <= V so the bulk-wait's dummy src slice of the vocab table stays
    # in bounds (a vocab smaller than one token tile is a degenerate case).
    if V >= sub:
        tn = min(tn, (V // sub) * sub)
    n_tiles = int(pl.cdiv(N, tn))
    n_pad = n_tiles * tn

    ids_flat = ids.reshape(-1).astype(jnp.int32)
    if n_pad != N:
        ids_flat = jnp.pad(ids_flat, (0, n_pad - N))   # pad with token 0 (in range)

    # LoRA-A rows are tiny (r elements each): gather them once with plain XLA
    # and stream them as a normal VMEM-blocked input instead of per-token DMAs.
    after_a = jnp.take(w_a, ids_flat, axis=0)          # (n_pad, r)
    # Fold scaling into B once (removes a per-tile broadcast-multiply + cast).
    w_b_scaled = (w_b.astype(jnp.float32) * float(scaling)).astype(w_b.dtype)

    kernel = functools.partial(_lora_embed_kernel, tn=tn, n_tiles=n_tiles)

    grid_spec = pltpu.PrefetchScalarGridSpec(
        num_scalar_prefetch=1,                 # ids -> SMEM, drive the DMA gather
        grid=(n_tiles,),
        in_specs=[
            pl.BlockSpec(memory_space=pl.ANY),                # W_base stays in HBM
            pl.BlockSpec((tn, r), lambda t, ids: (t, 0)),     # pre-gathered A rows
            pl.BlockSpec((r, D), lambda t, ids: (0, 0)),      # scaled B, resident
        ],
        out_specs=pl.BlockSpec((tn, D), lambda t, ids: (t, 0)),
        scratch_shapes=[
            pltpu.VMEM((2 * tn, D), w_base.dtype),            # double-buffered gather
            pltpu.SemaphoreType.DMA((2,)),                    # one sem per slot
        ],
    )

    out_flat = pl.pallas_call(
        kernel,
        out_shape=jax.ShapeDtypeStruct((n_pad, D), w_base.dtype),
        grid_spec=grid_spec,
        # Cross-tile double buffering carries scratch state between grid steps,
        # so the token axis must execute sequentially.
        compiler_params=pltpu.CompilerParams(
            dimension_semantics=("arbitrary",)),
    )(ids_flat, w_base, after_a, w_b_scaled)

    return out_flat[:N].reshape(B, S, D)


if __name__ == "__main__":
    # Small deterministic example consistent with the module:
    #   base nn.Embedding(V, D) weight -> [V, D]
    #   lora_embedding_A -> [V, r], lora_embedding_B -> [r, D]
    #   scaling = lora_alpha / r
    V, D = 256, 128          # vocab, embedding dim (lane-dense D)
    r, lora_alpha = 8, 16
    scaling = lora_alpha / r
    B, S = 2, 40             # N = 80 tokens

    key = jax.random.PRNGKey(0)
    k_ids, k_wb, k_a, k_b = jax.random.split(key, 4)

    ids = jax.random.randint(k_ids, (B, S), minval=0, maxval=V, dtype=jnp.int32)
    w_base = jax.random.normal(k_wb, (V, D), dtype=jnp.float32)
    # NOTE: PEFT zero-inits lora_embedding_A by default; use nonzero values so
    # the LoRA path is actually exercised numerically.
    w_a = jax.random.normal(k_a, (V, r), dtype=jnp.float32) * 0.1
    w_b = jax.random.normal(k_b, (r, D), dtype=jnp.float32) * 0.1

    # Reference of the PyTorch forward, computed in numpy (full f32 precision).
    ids_np = np.asarray(ids)
    ref = (np.asarray(w_base)[ids_np]
           + (np.asarray(w_a)[ids_np] @ np.asarray(w_b)) * scaling)

    # Multi-tile path: exercises priming, cross-tile prefetch, bulk drain and
    # last-tile padding (N=80, tn=32 -> 3 tiles, 16 padded tokens).
    out = lora_transposed_embedding_forward(ids, w_base, w_a, w_b, scaling,
                                            token_tile=32)
    out = jax.block_until_ready(out)
    assert out.shape == (B, S, D)
    assert np.allclose(np.asarray(out), ref, atol=1e-4, rtol=1e-4), \
        "multi-tile mismatch vs reference"

    # Single-tile path (default token_tile).
    out2 = lora_transposed_embedding_forward(ids, w_base, w_a, w_b, scaling)
    out2 = jax.block_until_ready(out2)
    assert np.allclose(np.asarray(out2), ref, atol=1e-4, rtol=1e-4), \
        "single-tile mismatch vs reference"

    print("KERNEL_OK")
</pallas_src>

<mosaic_0001>
module attributes {stable_mosaic.version = 11 : i64} {
  func.func @_lora_embed_kernel(%arg0: i32, %arg1: memref<96xi32, #tpu.memory_space<smem>>, %arg2: memref<256x128xf32, #tpu.memory_space<any>>, %arg3: memref<32x8xf32, #tpu.memory_space<vmem>>, %arg4: memref<8x128xf32, #tpu.memory_space<vmem>>, %arg5: memref<32x128xf32, #tpu.memory_space<vmem>>, %arg6: memref<64x128xf32, #tpu.memory_space<vmem>>, %arg7: memref<2x!tpu.dma_semaphore, #tpu.memory_space<semaphore_mem>>) attributes {dimension_semantics = [#tpu.dimension_semantics<arbitrary>], iteration_bounds = array<i64: 3>, scalar_prefetch = 1 : i64, scratch_operands = 2 : i64, tpu.core_type = #tpu.core_type<tc>, window_params = [{}, {transform_indices = @transform_1, window_bounds = array<i64: 32, 8>}, {pipeline_mode = #tpu.pipeline_mode<synchronous>, transform_indices = @transform_2, window_bounds = array<i64: 8, 128>}, {transform_indices = @transform_3, window_bounds = array<i64: 32, 128>}]} {
    %c0_i32 = arith.constant 0 : i32
    %0 = arith.cmpi eq, %arg0, %c0_i32 : i32
    %1 = arith.extui %0 : i1 to i32
    %c0_i32_0 = arith.constant 0 : i32
    %2 = arith.cmpi ne, %1, %c0_i32_0 : i32
    scf.if %2 {
      %c0_i32_16 = arith.constant 0 : i32
      %c4_i32 = arith.constant 4 : i32
      %30 = arith.addi %c0_i32_16, %c4_i32 : i32
      %c1_i32_17 = arith.constant 1 : i32
      scf.for %arg8 = %c0_i32_16 to %30 step %c1_i32_17  : i32 {
        %c1_i32_19 = arith.constant 1 : i32
        %31 = arith.muli %arg8, %c1_i32_19 : i32
        %c0_i32_20 = arith.constant 0 : i32
        %32 = arith.addi %c0_i32_20, %31 : i32
        %c8_i32 = arith.constant 8 : i32
        %33 = arith.muli %32, %c8_i32 : i32
        %c0_i32_21 = arith.constant 0 : i32
        %34 = arith.addi %33, %c0_i32_21 : i32
        %c0_i32_22 = arith.constant 0 : i32
        %35 = arith.addi %c0_i32_22, %34 : i32
        %36 = arith.index_cast %35 : i32 to index
        %37 = memref.load %arg1[%36] : memref<96xi32, #tpu.memory_space<smem>>
        %c0_i32_23 = arith.constant 0 : i32
        %38 = arith.addi %c0_i32_23, %34 : i32
        %c0_i32_24 = arith.constant 0 : i32
        %c0_i32_25 = arith.constant 0 : i32
        %39 = tpu.memref_slice %arg2[%37, %c0_i32_25] : memref<256x128xf32, #tpu.memory_space<any>> -> memref<1x128xf32, #tpu.memory_space<any>>
        %c0_i32_26 = arith.constant 0 : i32
        %40 = tpu.memref_slice %arg6[%38, %c0_i32_26] : memref<64x128xf32, #tpu.memory_space<vmem>> -> memref<1x128xf32, #tpu.memory_space<vmem>>
        %41 = tpu.memref_slice %arg7[%c0_i32_24] : memref<2x!tpu.dma_semaphore, #tpu.memory_space<semaphore_mem>> -> memref<1x!tpu.dma_semaphore, #tpu.memory_space<semaphore_mem>>
        %42 = tpu.memref_squeeze %41 : memref<1x!tpu.dma_semaphore, #tpu.memory_space<semaphore_mem>> -> memref<!tpu.dma_semaphore, #tpu.memory_space<semaphore_mem>>
        tpu.enqueue_dma source(%39 : memref<1x128xf32, #tpu.memory_space<any>>) target(%40 : memref<1x128xf32, #tpu.memory_space<vmem>>) target_semaphore(%42 : memref<!tpu.dma_semaphore, #tpu.memory_space<semaphore_mem>>)
        %c1_i32_27 = arith.constant 1 : i32
        %43 = arith.addi %33, %c1_i32_27 : i32
        %c0_i32_28 = arith.constant 0 : i32
        %44 = arith.addi %c0_i32_28, %43 : i32
        %45 = arith.index_cast %44 : i32 to index
        %46 = memref.load %arg1[%45] : memref<96xi32, #tpu.memory_space<smem>>
        %c0_i32_29 = arith.constant 0 : i32
        %47 = arith.addi %c0_i32_29, %43 : i32
        %c0_i32_30 = arith.constant 0 : i32
        %c0_i32_31 = arith.constant 0 : i32
        %48 = tpu.memref_slice %arg2[%46, %c0_i32_31] : memref<256x128xf32, #tpu.memory_space<any>> -> memref<1x128xf32, #tpu.memory_space<any>>
        %c0_i32_32 = arith.constant 0 : i32
        %49 = tpu.memref_slice %arg6[%47, %c0_i32_32] : memref<64x128xf32, #tpu.memory_space<vmem>> -> memref<1x128xf32, #tpu.memory_space<vmem>>
        %50 = tpu.memref_slice %arg7[%c0_i32_30] : memref<2x!tpu.dma_semaphore, #tpu.memory_space<semaphore_mem>> -> memref<1x!tpu.dma_semaphore, #tpu.memory_space<semaphore_mem>>
        %51 = tpu.memref_squeeze %50 : memref<1x!tpu.dma_semaphore, #tpu.memory_space<semaphore_mem>> -> memref<!tpu.dma_semaphore, #tpu.memory_space<semaphore_mem>>
        tpu.enqueue_dma source(%48 : memref<1x128xf32, #tpu.memory_space<any>>) target(%49 : memref<1x128xf32, #tpu.memory_space<vmem>>) target_semaphore(%51 : memref<!tpu.dma_semaphore, #tpu.memory_space<semaphore_mem>>)
        %c2_i32_33 = arith.constant 2 : i32
        %52 = arith.addi %33, %c2_i32_33 : i32
        %c0_i32_34 = arith.constant 0 : i32
        %53 = arith.addi %c0_i32_34, %52 : i32
        %54 = arith.index_cast %53 : i32 to index
        %55 = memref.load %arg1[%54] : memref<96xi32, #tpu.memory_space<smem>>
        %c0_i32_35 = arith.constant 0 : i32
        %56 = arith.addi %c0_i32_35, %52 : i32
        %c0_i32_36 = arith.constant 0 : i32
        %c0_i32_37 = arith.constant 0 : i32
        %57 = tpu.memref_slice %arg2[%55, %c0_i32_37] : memref<256x128xf32, #tpu.memory_space<any>> -> memref<1x128xf32, #tpu.memory_space<any>>
        %c0_i32_38 = arith.constant 0 : i32
        %58 = tpu.memref_slice %arg6[%56, %c0_i32_38] : memref<64x128xf32, #tpu.memory_space<vmem>> -> memref<1x128xf32, #tpu.memory_space<vmem>>
        %59 = tpu.memref_slice %arg7[%c0_i32_36] : memref<2x!tpu.dma_semaphore, #tpu.memory_space<semaphore_mem>> -> memref<1x!tpu.dma_semaphore, #tpu.memory_space<semaphore_mem>>
        %60 = tpu.memref_squeeze %59 : memref<1x!tpu.dma_semaphore, #tpu.memory_space<semaphore_mem>> -> memref<!tpu.dma_semaphore, #tpu.memory_space<semaphore_mem>>
        tpu.enqueue_dma source(%57 : memref<1x128xf32, #tpu.memory_space<any>>) target(%58 : memref<1x128xf32, #tpu.memory_space<vmem>>) target_semaphore(%60 : memref<!tpu.dma_semaphore, #tpu.memory_space<semaphore_mem>>)
        %c3_i32_39 = arith.constant 3 : i32
        %61 = arith.addi %33, %c3_i32_39 : i32
        %c0_i32_40 = arith.constant 0 : i32
        %62 = arith.addi %c0_i32_40, %61 : i32
        %63 = arith.index_cast %62 : i32 to index
        %64 = memref.load %arg1[%63] : memref<96xi32, #tpu.memory_space<smem>>
        %c0_i32_41 = arith.constant 0 : i32
        %65 = arith.addi %c0_i32_41, %61 : i32
        %c0_i32_42 = arith.constant 0 : i32
        %c0_i32_43 = arith.constant 0 : i32
        %66 = tpu.memref_slice %arg2[%64, %c0_i32_43] : memref<256x128xf32, #tpu.memory_space<any>> -> memref<1x128xf32, #tpu.memory_space<any>>
        %c0_i32_44 = arith.constant 0 : i32
        %67 = tpu.memref_slice %arg6[%65, %c0_i32_44] : memref<64x128xf32, #tpu.memory_space<vmem>> -> memref<1x128xf32, #tpu.memory_space<vmem>>
        %68 = tpu.memref_slice %arg7[%c0_i32_42] : memref<2x!tpu.dma_semaphore, #tpu.memory_space<semaphore_mem>> -> memref<1x!tpu.dma_semaphore, #tpu.memory_space<semaphore_mem>>
        %69 = tpu.memref_squeeze %68 : memref<1x!tpu.dma_semaphore, #tpu.memory_space<semaphore_mem>> -> memref<!tpu.dma_semaphore, #tpu.memory_space<semaphore_mem>>
        tpu.enqueue_dma source(%66 : memref<1x128xf32, #tpu.memory_space<any>>) target(%67 : memref<1x128xf32, #tpu.memory_space<vmem>>) target_semaphore(%69 : memref<!tpu.dma_semaphore, #tpu.memory_space<semaphore_mem>>)
        %c4_i32_45 = arith.constant 4 : i32
        %70 = arith.addi %33, %c4_i32_45 : i32
        %c0_i32_46 = arith.constant 0 : i32
        %71 = arith.addi %c0_i32_46, %70 : i32
        %72 = arith.index_cast %71 : i32 to index
        %73 = memref.load %arg1[%72] : memref<96xi32, #tpu.memory_space<smem>>
        %c0_i32_47 = arith.constant 0 : i32
        %74 = arith.addi %c0_i32_47, %70 : i32
        %c0_i32_48 = arith.constant 0 : i32
        %c0_i32_49 = arith.constant 0 : i32
        %75 = tpu.memref_slice %arg2[%73, %c0_i32_49] : memref<256x128xf32, #tpu.memory_space<any>> -> memref<1x128xf32, #tpu.memory_space<any>>
        %c0_i32_50 = arith.constant 0 : i32
        %76 = tpu.memref_slice %arg6[%74, %c0_i32_50] : memref<64x128xf32, #tpu.memory_space<vmem>> -> memref<1x128xf32, #tpu.memory_space<vmem>>
        %77 = tpu.memref_slice %arg7[%c0_i32_48] : memref<2x!tpu.dma_semaphore, #tpu.memory_space<semaphore_mem>> -> memref<1x!tpu.dma_semaphore, #tpu.memory_space<semaphore_mem>>
        %78 = tpu.memref_squeeze %77 : memref<1x!tpu.dma_semaphore, #tpu.memory_space<semaphore_mem>> -> memref<!tpu.dma_semaphore, #tpu.memory_space<semaphore_mem>>
        tpu.enqueue_dma source(%75 : memref<1x128xf32, #tpu.memory_space<any>>) target(%76 : memref<1x128xf32, #tpu.memory_space<vmem>>) target_semaphore(%78 : memref<!tpu.dma_semaphore, #tpu.memory_space<semaphore_mem>>)
        %c5_i32 = arith.constant 5 : i32
        %79 = arith.addi %33, %c5_i32 : i32
        %c0_i32_51 = arith.constant 0 : i32
        %80 = arith.addi %c0_i32_51, %79 : i32
        %81 = arith.index_cast %80 : i32 to index
        %82 = memref.load %arg1[%81] : memref<96xi32, #tpu.memory_space<smem>>
        %c0_i32_52 = arith.constant 0 : i32
        %83 = arith.addi %c0_i32_52, %79 : i32
        %c0_i32_53 = arith.constant 0 : i32
        %c0_i32_54 = arith.constant 0 : i32
        %84 = tpu.memref_slice %arg2[%82, %c0_i32_54] : memref<256x128xf32, #tpu.memory_space<any>> -> memref<1x128xf32, #tpu.memory_space<any>>
        %c0_i32_55 = arith.constant 0 : i32
        %85 = tpu.memref_slice %arg6[%83, %c0_i32_55] : memref<64x128xf32, #tpu.memory_space<vmem>> -> memref<1x128xf32, #tpu.memory_space<vmem>>
        %86 = tpu.memref_slice %arg7[%c0_i32_53] : memref<2x!tpu.dma_semaphore, #tpu.memory_space<semaphore_mem>> -> memref<1x!tpu.dma_semaphore, #tpu.memory_space<semaphore_mem>>
        %87 = tpu.memref_squeeze %86 : memref<1x!tpu.dma_semaphore, #tpu.memory_space<semaphore_mem>> -> memref<!tpu.dma_semaphore, #tpu.memory_space<semaphore_mem>>
        tpu.enqueue_dma source(%84 : memref<1x128xf32, #tpu.memory_space<any>>) target(%85 : memref<1x128xf32, #tpu.memory_space<vmem>>) target_semaphore(%87 : memref<!tpu.dma_semaphore, #tpu.memory_space<semaphore_mem>>)
        %c6_i32 = arith.constant 6 : i32
        %88 = arith.addi %33, %c6_i32 : i32
        %c0_i32_56 = arith.constant 0 : i32
        %89 = arith.addi %c0_i32_56, %88 : i32
        %90 = arith.index_cast %89 : i32 to index
        %91 = memref.load %arg1[%90] : memref<96xi32, #tpu.memory_space<smem>>
        %c0_i32_57 = arith.constant 0 : i32
        %92 = arith.addi %c0_i32_57, %88 : i32
        %c0_i32_58 = arith.constant 0 : i32
        %c0_i32_59 = arith.constant 0 : i32
        %93 = tpu.memref_slice %arg2[%91, %c0_i32_59] : memref<256x128xf32, #tpu.memory_space<any>> -> memref<1x128xf32, #tpu.memory_space<any>>
        %c0_i32_60 = arith.constant 0 : i32
        %94 = tpu.memref_slice %arg6[%92, %c0_i32_60] : memref<64x128xf32, #tpu.memory_space<vmem>> -> memref<1x128xf32, #tpu.memory_space<vmem>>
        %95 = tpu.memref_slice %arg7[%c0_i32_58] : memref<2x!tpu.dma_semaphore, #tpu.memory_space<semaphore_mem>> -> memref<1x!tpu.dma_semaphore, #tpu.memory_space<semaphore_mem>>
        %96 = tpu.memref_squeeze %95 : memref<1x!tpu.dma_semaphore, #tpu.memory_space<semaphore_mem>> -> memref<!tpu.dma_semaphore, #tpu.memory_space<semaphore_mem>>
        tpu.enqueue_dma source(%93 : memref<1x128xf32, #tpu.memory_space<any>>) target(%94 : memref<1x128xf32, #tpu.memory_space<vmem>>) target_semaphore(%96 : memref<!tpu.dma_semaphore, #tpu.memory_space<semaphore_mem>>)
        %c7_i32 = arith.constant 7 : i32
        %97 = arith.addi %33, %c7_i32 : i32
        %c0_i32_61 = arith.constant 0 : i32
        %98 = arith.addi %c0_i32_61, %97 : i32
        %99 = arith.index_cast %98 : i32 to index
        %100 = memref.load %arg1[%99] : memref<96xi32, #tpu.memory_space<smem>>
        %c0_i32_62 = arith.constant 0 : i32
        %101 = arith.addi %c0_i32_62, %97 : i32
        %c0_i32_63 = arith.constant 0 : i32
        %c0_i32_64 = arith.constant 0 : i32
        %102 = tpu.memref_slice %arg2[%100, %c0_i32_64] : memref<256x128xf32, #tpu.memory_space<any>> -> memref<1x128xf32, #tpu.memory_space<any>>
        %c0_i32_65 = arith.constant 0 : i32
        %103 = tpu.memref_slice %arg6[%101, %c0_i32_65] : memref<64x128xf32, #tpu.memory_space<vmem>> -> memref<1x128xf32, #tpu.memory_space<vmem>>
        %104 = tpu.memref_slice %arg7[%c0_i32_63] : memref<2x!tpu.dma_semaphore, #tpu.memory_space<semaphore_mem>> -> memref<1x!tpu.dma_semaphore, #tpu.memory_space<semaphore_mem>>
        %105 = tpu.memref_squeeze %104 : memref<1x!tpu.dma_semaphore, #tpu.memory_space<semaphore_mem>> -> memref<!tpu.dma_semaphore, #tpu.memory_space<semaphore_mem>>
        tpu.enqueue_dma source(%102 : memref<1x128xf32, #tpu.memory_space<any>>) target(%103 : memref<1x128xf32, #tpu.memory_space<vmem>>) target_semaphore(%105 : memref<!tpu.dma_semaphore, #tpu.memory_space<semaphore_mem>>)
      }
      %c4_i32_18 = arith.constant 4 : i32
    } else {
    }
    %c1_i32 = arith.constant 1 : i32
    %3 = arith.addi %arg0, %c1_i32 : i32
    %c3_i32 = arith.constant 3 : i32
    %4 = arith.cmpi slt, %3, %c3_i32 : i32
    %5 = arith.extui %4 : i1 to i32
    %c0_i32_1 = arith.constant 0 : i32
    %6 = arith.cmpi ne, %5, %c0_i32_1 : i32
    scf.if %6 {
      %c1_i32_16 = arith.constant 1 : i32
      %30 = arith.addi %arg0, %c1_i32_16 : i32
      %c1_i32_17 = arith.constant 1 : i32
      %31 = arith.addi %arg0, %c1_i32_17 : i32
      %c2_i32_18 = arith.constant 2 : i32
      %c0_i32_19 = arith.constant 0 : i32
      %32 = arith.cmpi eq, %c2_i32_18, %c0_i32_19 : i32
      %c1_i32_20 = arith.constant 1 : i32
      %33 = arith.select %32, %c1_i32_20, %c2_i32_18 : i32
      %34 = arith.remsi %31, %33 : i32
      %c0_i32_21 = arith.constant 0 : i32
      %35 = arith.cmpi ne, %34, %c0_i32_21 : i32
      %c0_i32_22 = arith.constant 0 : i32
      %36 = arith.cmpi slt, %34, %c0_i32_22 : i32
      %c0_i32_23 = arith.constant 0 : i32
      %37 = arith.cmpi slt, %33, %c0_i32_23 : i32
      %38 = arith.xori %36, %37 : i1
      %39 = arith.andi %38, %35 : i1
      %40 = arith.addi %34, %33 : i32
      %41 = arith.select %39, %40, %34 : i32
      %c32_i32_24 = arith.constant 32 : i32
      %42 = arith.muli %30, %c32_i32_24 : i32
      %c32_i32_25 = arith.constant 32 : i32
      %43 = arith.muli %41, %c32_i32_25 : i32
      %c0_i32_26 = arith.constant 0 : i32
      %c4_i32 = arith.constant 4 : i32
      %44 = arith.addi %c0_i32_26, %c4_i32 : i32
      %c1_i32_27 = arith.constant 1 : i32
      scf.for %arg8 = %c0_i32_26 to %44 step %c1_i32_27  : i32 {
        %c1_i32_29 = arith.constant 1 : i32
        %45 = arith.muli %arg8, %c1_i32_29 : i32
        %c0_i32_30 = arith.constant 0 : i32
        %46 = arith.addi %c0_i32_30, %45 : i32
        %c8_i32 = arith.constant 8 : i32
        %47 = arith.muli %46, %c8_i32 : i32
        %c0_i32_31 = arith.constant 0 : i32
        %48 = arith.addi %47, %c0_i32_31 : i32
        %49 = arith.addi %42, %48 : i32
        %50 = arith.index_cast %49 : i32 to index
        %51 = memref.load %arg1[%50] : memref<96xi32, #tpu.memory_space<smem>>
        %52 = arith.addi %43, %48 : i32
        %c0_i32_32 = arith.constant 0 : i32
        %53 = tpu.memref_slice %arg2[%51, %c0_i32_32] : memref<256x128xf32, #tpu.memory_space<any>> -> memref<1x128xf32, #tpu.memory_space<any>>
        %c0_i32_33 = arith.constant 0 : i32
        %54 = tpu.memref_slice %arg6[%52, %c0_i32_33] : memref<64x128xf32, #tpu.memory_space<vmem>> -> memref<1x128xf32, #tpu.memory_space<vmem>>
        %55 = tpu.memref_slice %arg7[%41] : memref<2x!tpu.dma_semaphore, #tpu.memory_space<semaphore_mem>> -> memref<1x!tpu.dma_semaphore, #tpu.memory_space<semaphore_mem>>
        %56 = tpu.memref_squeeze %55 : memref<1x!tpu.dma_semaphore, #tpu.memory_space<semaphore_mem>> -> memref<!tpu.dma_semaphore, #tpu.memory_space<semaphore_mem>>
        tpu.enqueue_dma source(%53 : memref<1x128xf32, #tpu.memory_space<any>>) target(%54 : memref<1x128xf32, #tpu.memory_space<vmem>>) target_semaphore(%56 : memref<!tpu.dma_semaphore, #tpu.memory_space<semaphore_mem>>)
        %c1_i32_34 = arith.constant 1 : i32
        %57 = arith.addi %47, %c1_i32_34 : i32
        %58 = arith.addi %42, %57 : i32
        %59 = arith.index_cast %58 : i32 to index
        %60 = memref.load %arg1[%59] : memref<96xi32, #tpu.memory_space<smem>>
        %61 = arith.addi %43, %57 : i32
        %c0_i32_35 = arith.constant 0 : i32
        %62 = tpu.memref_slice %arg2[%60, %c0_i32_35] : memref<256x128xf32, #tpu.memory_space<any>> -> memref<1x128xf32, #tpu.memory_space<any>>
        %c0_i32_36 = arith.constant 0 : i32
        %63 = tpu.memref_slice %arg6[%61, %c0_i32_36] : memref<64x128xf32, #tpu.memory_space<vmem>> -> memref<1x128xf32, #tpu.memory_space<vmem>>
        %64 = tpu.memref_slice %arg7[%41] : memref<2x!tpu.dma_semaphore, #tpu.memory_space<semaphore_mem>> -> memref<1x!tpu.dma_semaphore, #tpu.memory_space<semaphore_mem>>
        %65 = tpu.memref_squeeze %64 : memref<1x!tpu.dma_semaphore, #tpu.memory_space<semaphore_mem>> -> memref<!tpu.dma_semaphore, #tpu.memory_space<semaphore_mem>>
        tpu.enqueue_dma source(%62 : memref<1x128xf32, #tpu.memory_space<any>>) target(%63 : memref<1x128xf32, #tpu.memory_space<vmem>>) target_semaphore(%65 : memref<!tpu.dma_semaphore, #tpu.memory_space<semaphore_mem>>)
        %c2_i32_37 = arith.constant 2 : i32
        %66 = arith.addi %47, %c2_i32_37 : i32
        %67 = arith.addi %42, %66 : i32
        %68 = arith.index_cast %67 : i32 to index
        %69 = memref.load %arg1[%68] : memref<96xi32, #tpu.memory_space<smem>>
        %70 = arith.addi %43, %66 : i32
        %c0_i32_38 = arith.constant 0 : i32
        %71 = tpu.memref_slice %arg2[%69, %c0_i32_38] : memref<256x128xf32, #tpu.memory_space<any>> -> memref<1x128xf32, #tpu.memory_space<any>>
        %c0_i32_39 = arith.constant 0 : i32
        %72 = tpu.memref_slice %arg6[%70, %c0_i32_39] : memref<64x128xf32, #tpu.memory_space<vmem>> -> memref<1x128xf32, #tpu.memory_space<vmem>>
        %73 = tpu.memref_slice %arg7[%41] : memref<2x!tpu.dma_semaphore, #tpu.memory_space<semaphore_mem>> -> memref<1x!tpu.dma_semaphore, #tpu.memory_space<semaphore_mem>>
        %74 = tpu.memref_squeeze %73 : memref<1x!tpu.dma_semaphore, #tpu.memory_space<semaphore_mem>> -> memref<!tpu.dma_semaphore, #tpu.memory_space<semaphore_mem>>
        tpu.enqueue_dma source(%71 : memref<1x128xf32, #tpu.memory_space<any>>) target(%72 : memref<1x128xf32, #tpu.memory_space<vmem>>) target_semaphore(%74 : memref<!tpu.dma_semaphore, #tpu.memory_space<semaphore_mem>>)
        %c3_i32_40 = arith.constant 3 : i32
        %75 = arith.addi %47, %c3_i32_40 : i32
        %76 = arith.addi %42, %75 : i32
        %77 = arith.index_cast %76 : i32 to index
        %78 = memref.load %arg1[%77] : memref<96xi32, #tpu.memory_space<smem>>
        %79 = arith.addi %43, %75 : i32
        %c0_i32_41 = arith.constant 0 : i32
        %80 = tpu.memref_slice %arg2[%78, %c0_i32_41] : memref<256x128xf32, #tpu.memory_space<any>> -> memref<1x128xf32, #tpu.memory_space<any>>
        %c0_i32_42 = arith.constant 0 : i32
        %81 = tpu.memref_slice %arg6[%79, %c0_i32_42] : memref<64x128xf32, #tpu.memory_space<vmem>> -> memref<1x128xf32, #tpu.memory_space<vmem>>
        %82 = tpu.memref_slice %arg7[%41] : memref<2x!tpu.dma_semaphore, #tpu.memory_space<semaphore_mem>> -> memref<1x!tpu.dma_semaphore, #tpu.memory_space<semaphore_mem>>
        %83 = tpu.memref_squeeze %82 : memref<1x!tpu.dma_semaphore, #tpu.memory_space<semaphore_mem>> -> memref<!tpu.dma_semaphore, #tpu.memory_space<semaphore_mem>>
        tpu.enqueue_dma source(%80 : memref<1x128xf32, #tpu.memory_space<any>>) target(%81 : memref<1x128xf32, #tpu.memory_space<vmem>>) target_semaphore(%83 : memref<!tpu.dma_semaphore, #tpu.memory_space<semaphore_mem>>)
        %c4_i32_43 = arith.constant 4 : i32
        %84 = arith.addi %47, %c4_i32_43 : i32
        %85 = arith.addi %42, %84 : i32
        %86 = arith.index_cast %85 : i32 to index
        %87 = memref.load %arg1[%86] : memref<96xi32, #tpu.memory_space<smem>>
        %88 = arith.addi %43, %84 : i32
        %c0_i32_44 = arith.constant 0 : i32
        %89 = tpu.memref_slice %arg2[%87, %c0_i32_44] : memref<256x128xf32, #tpu.memory_space<any>> -> memref<1x128xf32, #tpu.memory_space<any>>
        %c0_i32_45 = arith.constant 0 : i32
        %90 = tpu.memref_slice %arg6[%88, %c0_i32_45] : memref<64x128xf32, #tpu.memory_space<vmem>> -> memref<1x128xf32, #tpu.memory_space<vmem>>
        %91 = tpu.memref_slice %arg7[%41] : memref<2x!tpu.dma_semaphore, #tpu.memory_space<semaphore_mem>> -> memref<1x!tpu.dma_semaphore, #tpu.memory_space<semaphore_mem>>
        %92 = tpu.memref_squeeze %91 : memref<1x!tpu.dma_semaphore, #tpu.memory_space<semaphore_mem>> -> memref<!tpu.dma_semaphore, #tpu.memory_space<semaphore_mem>>
        tpu.enqueue_dma source(%89 : memref<1x128xf32, #tpu.memory_space<any>>) target(%90 : memref<1x128xf32, #tpu.memory_space<vmem>>) target_semaphore(%92 : memref<!tpu.dma_semaphore, #tpu.memory_space<semaphore_mem>>)
        %c5_i32 = arith.constant 5 : i32
        %93 = arith.addi %47, %c5_i32 : i32
        %94 = arith.addi %42, %93 : i32
        %95 = arith.index_cast %94 : i32 to index
        %96 = memref.load %arg1[%95] : memref<96xi32, #tpu.memory_space<smem>>
        %97 = arith.addi %43, %93 : i32
        %c0_i32_46 = arith.constant 0 : i32
        %98 = tpu.memref_slice %arg2[%96, %c0_i32_46] : memref<256x128xf32, #tpu.memory_space<any>> -> memref<1x128xf32, #tpu.memory_space<any>>
        %c0_i32_47 = arith.constant 0 : i32
        %99 = tpu.memref_slice %arg6[%97, %c0_i32_47] : memref<64x128xf32, #tpu.memory_space<vmem>> -> memref<1x128xf32, #tpu.memory_space<vmem>>
        %100 = tpu.memref_slice %arg7[%41] : memref<2x!tpu.dma_semaphore, #tpu.memory_space<semaphore_mem>> -> memref<1x!tpu.dma_semaphore, #tpu.memory_space<semaphore_mem>>
        %101 = tpu.memref_squeeze %100 : memref<1x!tpu.dma_semaphore, #tpu.memory_space<semaphore_mem>> -> memref<!tpu.dma_semaphore, #tpu.memory_space<semaphore_mem>>
        tpu.enqueue_dma source(%98 : memref<1x128xf32, #tpu.memory_space<any>>) target(%99 : memref<1x128xf32, #tpu.memory_space<vmem>>) target_semaphore(%101 : memref<!tpu.dma_semaphore, #tpu.memory_space<semaphore_mem>>)
        %c6_i32 = arith.constant 6 : i32
        %102 = arith.addi %47, %c6_i32 : i32
        %103 = arith.addi %42, %102 : i32
        %104 = arith.index_cast %103 : i32 to index
        %105 = memref.load %arg1[%104] : memref<96xi32, #tpu.memory_space<smem>>
        %106 = arith.addi %43, %102 : i32
        %c0_i32_48 = arith.constant 0 : i32
        %107 = tpu.memref_slice %arg2[%105, %c0_i32_48] : memref<256x128xf32, #tpu.memory_space<any>> -> memref<1x128xf32, #tpu.memory_space<any>>
        %c0_i32_49 = arith.constant 0 : i32
        %108 = tpu.memref_slice %arg6[%106, %c0_i32_49] : memref<64x128xf32, #tpu.memory_space<vmem>> -> memref<1x128xf32, #tpu.memory_space<vmem>>
        %109 = tpu.memref_slice %arg7[%41] : memref<2x!tpu.dma_semaphore, #tpu.memory_space<semaphore_mem>> -> memref<1x!tpu.dma_semaphore, #tpu.memory_space<semaphore_mem>>
        %110 = tpu.memref_squeeze %109 : memref<1x!tpu.dma_semaphore, #tpu.memory_space<semaphore_mem>> -> memref<!tpu.dma_semaphore, #tpu.memory_space<semaphore_mem>>
        tpu.enqueue_dma source(%107 : memref<1x128xf32, #tpu.memory_space<any>>) target(%108 : memref<1x128xf32, #tpu.memory_space<vmem>>) target_semaphore(%110 : memref<!tpu.dma_semaphore, #tpu.memory_space<semaphore_mem>>)
        %c7_i32 = arith.constant 7 : i32
        %111 = arith.addi %47, %c7_i32 : i32
        %112 = arith.addi %42, %111 : i32
        %113 = arith.index_cast %112 : i32 to index
        %114 = memref.load %arg1[%113] : memref<96xi32, #tpu.memory_space<smem>>
        %115 = arith.addi %43, %111 : i32
        %c0_i32_50 = arith.constant 0 : i32
        %116 = tpu.memref_slice %arg2[%114, %c0_i32_50] : memref<256x128xf32, #tpu.memory_space<any>> -> memref<1x128xf32, #tpu.memory_space<any>>
        %c0_i32_51 = arith.constant 0 : i32
        %117 = tpu.memref_slice %arg6[%115, %c0_i32_51] : memref<64x128xf32, #tpu.memory_space<vmem>> -> memref<1x128xf32, #tpu.memory_space<vmem>>
        %118 = tpu.memref_slice %arg7[%41] : memref<2x!tpu.dma_semaphore, #tpu.memory_space<semaphore_mem>> -> memref<1x!tpu.dma_semaphore, #tpu.memory_space<semaphore_mem>>
        %119 = tpu.memref_squeeze %118 : memref<1x!tpu.dma_semaphore, #tpu.memory_space<semaphore_mem>> -> memref<!tpu.dma_semaphore, #tpu.memory_space<semaphore_mem>>
        tpu.enqueue_dma source(%116 : memref<1x128xf32, #tpu.memory_space<any>>) target(%117 : memref<1x128xf32, #tpu.memory_space<vmem>>) target_semaphore(%119 : memref<!tpu.dma_semaphore, #tpu.memory_space<semaphore_mem>>)
      }
      %c4_i32_28 = arith.constant 4 : i32
    } else {
    }
    %c2_i32 = arith.constant 2 : i32
    %c0_i32_2 = arith.constant 0 : i32
    %7 = arith.cmpi eq, %c2_i32, %c0_i32_2 : i32
    %c1_i32_3 = arith.constant 1 : i32
    %8 = arith.select %7, %c1_i32_3, %c2_i32 : i32
    %9 = arith.remsi %arg0, %8 : i32
    %c0_i32_4 = arith.constant 0 : i32
    %10 = arith.cmpi ne, %9, %c0_i32_4 : i32
    %c0_i32_5 = arith.constant 0 : i32
    %11 = arith.cmpi slt, %9, %c0_i32_5 : i32
    %c0_i32_6 = arith.constant 0 : i32
    %12 = arith.cmpi slt, %8, %c0_i32_6 : i32
    %13 = arith.xori %11, %12 : i1
    %14 = arith.andi %13, %10 : i1
    %15 = arith.addi %9, %8 : i32
    %16 = arith.select %14, %15, %9 : i32
    %c32_i32 = arith.constant 32 : i32
    %17 = arith.muli %16, %c32_i32 : i32
    %18 = tpu.assume_multiple %17, 8 : i32
    %c0_i32_7 = arith.constant 0 : i32
    %c0_i32_8 = arith.constant 0 : i32
    %19 = tpu.memref_slice %arg2[%c0_i32_7, %c0_i32_8] : memref<256x128xf32, #tpu.memory_space<any>> -> memref<32x128xf32, #tpu.memory_space<any>>
    %c0_i32_9 = arith.constant 0 : i32
    %20 = tpu.memref_slice %arg6[%18, %c0_i32_9] : memref<64x128xf32, #tpu.memory_space<vmem>> -> memref<32x128xf32, #tpu.memory_space<vmem>>
    %21 = tpu.memref_slice %arg7[%16] : memref<2x!tpu.dma_semaphore, #tpu.memory_space<semaphore_mem>> -> memref<1x!tpu.dma_semaphore, #tpu.memory_space<semaphore_mem>>
    %22 = tpu.memref_squeeze %21 : memref<1x!tpu.dma_semaphore, #tpu.memory_space<semaphore_mem>> -> memref<!tpu.dma_semaphore, #tpu.memory_space<semaphore_mem>>
    tpu.wait_dma2 semaphore(%22 : memref<!tpu.dma_semaphore, #tpu.memory_space<semaphore_mem>>) src(%19 : memref<32x128xf32, #tpu.memory_space<any>>) dst(%20 : memref<32x128xf32, #tpu.memory_space<vmem>>)
    %c0 = arith.constant 0 : index
    %c0_10 = arith.constant 0 : index
    %23 = vector.load %arg3[%c0, %c0_10] : memref<32x8xf32, #tpu.memory_space<vmem>>, vector<32x8xf32>
    %c0_11 = arith.constant 0 : index
    %c0_12 = arith.constant 0 : index
    %24 = vector.load %arg4[%c0_11, %c0_12] : memref<8x128xf32, #tpu.memory_space<vmem>>, vector<8x128xf32>
    %cst = arith.constant dense<0.000000e+00> : vector<32x128xf32>
    %25 = tpu.matmul %23, %24, %cst {dimension_numbers = #tpu.dot_dimension_numbers<[1], [0], [0], [1], [0, 0, 1, 1], [], []>} : vector<32x8xf32>, vector<8x128xf32>, vector<32x128xf32> -> vector<32x128xf32>
    %26 = arith.index_cast %18 : i32 to index
    %c0_13 = arith.constant 0 : index
    %27 = vector.load %arg6[%26, %c0_13] : memref<64x128xf32, #tpu.memory_space<vmem>>, vector<32x128xf32>
    %28 = arith.addf %27, %25 : vector<32x128xf32>
    %c0_14 = arith.constant 0 : index
    %c0_15 = arith.constant 0 : index
    %29 = vector.load %arg5[%c0_14, %c0_15] : memref<32x128xf32, #tpu.memory_space<vmem>>, vector<32x128xf32>
    tpu.vector_store %arg5[%c0_14, %c0_15], %28 {strides = array<i32>} : memref<32x128xf32, #tpu.memory_space<vmem>>, vector<32x128xf32>,
    return
  }
  func.func @transform_1(%arg0: i32, %arg1: memref<96xi32, #tpu.memory_space<smem>>) -> (i32, i32) {
    %c0_i32 = arith.constant 0 : i32
    %c0_i32_0 = arith.constant 0 : i32
    return %arg0, %c0_i32 : i32, i32
  }
  func.func @transform_2(%arg0: i32, %arg1: memref<96xi32, #tpu.memory_space<smem>>) -> (i32, i32) {
    %c0_i32 = arith.constant 0 : i32
    %c0_i32_0 = arith.constant 0 : i32
    %c0_i32_1 = arith.constant 0 : i32
    return %c0_i32, %c0_i32_0 : i32, i32
  }
  func.func @transform_3(%arg0: i32, %arg1: memref<96xi32, #tpu.memory_space<smem>>) -> (i32, i32) {
    %c0_i32 = arith.constant 0 : i32
    %c0_i32_0 = arith.constant 0 : i32
    return %arg0, %c0_i32 : i32, i32
  }
}

</mosaic_0001>

<llo_original>
// kernel: tpu_custom_call.1
$region0: #{tpu_custom_call.1}
  #allocation0 [shape = 'u32[]', space=smem, size = 0x4, offset = 0x4, fixed_abs, tag = 'smem constant byte address 0x4 - core index']
  #allocation1 [shape = 'u32[144,128]{1,0:T(1,128)}', space=vmem, size = 0x12000, scoped, tag = 'internal scratch']
  #allocation2 [shape = 'f32[64,128]{1,0:T(8,128)}', space=vmem, size = 0x8000, scoped, tag = 'scratch operand']
  #allocation3 [shape = 's32[2]{0}', space=sflag, size = 0x8, scoped, tag = 'scratch operand']
  #allocation4 [shape = 's32[1]{0}', space=sflag, size = 0x4, scoped, tag = 'scoped memory for tpu_custom_call.1']
  #allocation5 [shape = 'u8[512]{0}', space=smem, size = 0x200, scoped, tag = 'prefetched SMEM operand 0']
  #allocation8 [shape = 's32[]', space=sflag, size = 0x4, offset = 0, fixed_abs, tag = 'sflag constant byte address 0x0 - dummy sync flag']
  #allocation9 [shape = 's32[]', space=sflag, size = 0x4, offset = 0, fixed_abs, tag = 'sflag constant byte address 0x0 - dummy sync flag']
  #allocation10 [shape = 'u32[]', space=smem, size = 0x4, offset = 0x44, fixed_abs, tag = 'smem constant byte address 0x44 - assertion arg 0']
  #allocation11 [shape = 'u32[]', space=smem, size = 0x4, offset = 0x48, fixed_abs, tag = 'smem constant byte address 0x48 - assertion arg 1']
  #allocation12 [shape = 's32[]', space=sflag, size = 0x4, offset = 0, fixed_abs, tag = 'sflag constant byte address 0x0 - dummy sync flag']
  #allocation13 [shape = 's32[]', space=sflag, size = 0x4, offset = 0, fixed_abs, tag = 'sflag constant byte address 0x0 - dummy sync flag']
  #allocation14 [shape = 's32[]', space=sflag, size = 0x4, offset = 0, fixed_abs, tag = 'sflag constant byte address 0x0 - dummy sync flag']
  #allocation15 [shape = 's32[]', space=sflag, size = 0x4, offset = 0, fixed_abs, tag = 'sflag constant byte address 0x0 - dummy sync flag']
  #allocation16 [shape = 's32[]', space=sflag, size = 0x4, offset = 0, fixed_abs, tag = 'sflag constant byte address 0x0 - dummy sync flag']
  #allocation17 [shape = 's32[]', space=sflag, size = 0x4, offset = 0, fixed_abs, tag = 'sflag constant byte address 0x0 - dummy sync flag']
  #allocation18 [shape = 's32[]', space=sflag, size = 0x4, offset = 0, fixed_abs, tag = 'sflag constant byte address 0x0 - dummy sync flag']
  #allocation19 [shape = 's32[]', space=sflag, size = 0x4, offset = 0, fixed_abs, tag = 'sflag constant byte address 0x0 - dummy sync flag']
  #allocation20 [shape = 's32[]', space=sflag, size = 0x4, offset = 0, fixed_abs, tag = 'sflag constant byte address 0x0 - dummy sync flag']
  #allocation21 [shape = 's32[]', space=sflag, size = 0x4, offset = 0, fixed_abs, tag = 'sflag constant byte address 0x0 - dummy sync flag']
  #allocation22 [shape = 's32[]', space=sflag, size = 0x4, offset = 0, fixed_abs, tag = 'sflag constant byte address 0x0 - dummy sync flag']
  #allocation23 [shape = 's32[]', space=sflag, size = 0x4, offset = 0, fixed_abs, tag = 'sflag constant byte address 0x0 - dummy sync flag']
  #allocation24 [shape = 's32[]', space=sflag, size = 0x4, offset = 0, fixed_abs, tag = 'sflag constant byte address 0x0 - dummy sync flag']
  #allocation25 [shape = 's32[]', space=sflag, size = 0x4, offset = 0, fixed_abs, tag = 'sflag constant byte address 0x0 - dummy sync flag']
  #allocation26 [shape = 's32[]', space=sflag, size = 0x4, offset = 0, fixed_abs, tag = 'sflag constant byte address 0x0 - dummy sync flag']
  #allocation27 [shape = 's32[]', space=sflag, size = 0x4, offset = 0, fixed_abs, tag = 'sflag constant byte address 0x0 - dummy sync flag']
  #allocation28 [shape = 's32[]', space=sflag, size = 0x4, offset = 0, fixed_abs, tag = 'sflag constant byte address 0x0 - dummy sync flag']
  #allocation29 [shape = 's32[]', space=sflag, size = 0x4, offset = 0, fixed_abs, tag = 'sflag constant byte address 0x0 - dummy sync flag']
  #allocation30 [shape = 's32[]', space=sflag, size = 0x4, offset = 0, fixed_abs, tag = 'sflag constant byte address 0x0 - dummy sync flag']
  #allocation31 [shape = 's32[]', space=sflag, size = 0x4, offset = 0, fixed_abs, tag = 'sflag constant byte address 0x0 - dummy sync flag']
  #allocation32 [shape = 's32[]', space=sflag, size = 0x4, offset = 0, fixed_abs, tag = 'sflag constant byte address 0x0 - dummy sync flag']
  #allocation33 [shape = 's32[]', space=sflag, size = 0x4, offset = 0, fixed_abs, tag = 'sflag constant byte address 0x0 - dummy sync flag']
  #allocation34 [shape = 's32[]', space=sflag, size = 0x4, offset = 0, fixed_abs, tag = 'sflag constant byte address 0x0 - dummy sync flag']
  #allocation35 [shape = 's32[]', space=sflag, size = 0x4, offset = 0, fixed_abs, tag = 'sflag constant byte address 0x0 - dummy sync flag']
  #allocation36 [shape = 's32[]', space=sflag, size = 0x4, offset = 0, fixed_abs, tag = 'sflag constant byte address 0x0 - dummy sync flag']
  #allocation37 [shape = 's32[]', space=sflag, size = 0x4, offset = 0, fixed_abs, tag = 'sflag constant byte address 0x0 - dummy sync flag']
  #allocation38 [shape = 's32[]', space=sflag, size = 0x4, offset = 0, fixed_abs, tag = 'sflag constant byte address 0x0 - dummy sync flag']
  #allocation39 [shape = 's32[]', space=sflag, size = 0x4, offset = 0, fixed_abs, tag = 'sflag constant byte address 0x0 - dummy sync flag']
  #allocation40 [shape = 's32[]', space=sflag, size = 0x4, offset = 0, fixed_abs, tag = 'sflag constant byte address 0x0 - dummy sync flag']
  #allocation41 [shape = 's32[]', space=sflag, size = 0x4, offset = 0, fixed_abs, tag = 'sflag constant byte address 0x0 - dummy sync flag']
  %s0 = inlined_call_operand.vmem [shape: s32[96], index: 0, kind: input, shape index: {}]
  %s1 = inlined_call_operand.hbm [shape: f32[256,128], index: 1, kind: input, shape index: {}]
  %s2 = inlined_call_operand.vmem [shape: f32[96,8], index: 2, kind: input, shape index: {}]
  %s3 = inlined_call_operand.vmem [shape: f32[8,128], index: 3, kind: input, shape index: {}]
  %s4 = inlined_call_operand.hbm [shape: f32[96,128], index: 4, kind: output, shape index: {}]
  %s5 = sld [smem:[#allocation0]]
  $region127: #{tpu_custom_call.1} parent=0
    _
  %s7 = ssub.s32 1, %s5
  %s8 = scalar_select 0, %s7, %s5
  %s9 = sshll.u32 %s0, 4
  %s10 = int_to_ptr.vmem [resolvable:$true] %s9
  %12 = dma.vmem_to_smem %s10, 16, [#allocation5], [#allocation4]
  %13 = dma.done [#allocation4], 16
  %14 = sfence
  $region1: #{tpu_custom_call.1} parent=0
    #allocation6 [shape = 'u8[32768]{0}', space=vmem, size = 0x8000, scoped, tag = 'output window, operand 0']
    #allocation7 [shape = 's32[2]{0}', space=sflag, size = 0x8, scoped, tag = 'scoped memory for tpu_custom_call.1']
    %15 = vsyncpa [#allocation7], 0
    %s16 = scalar_lea.sflag [#allocation7], 1
    %17 = vsyncpa %s16, 0
    loop: start=0, step=1, limit=5
    $region2: #{tpu_custom_call.1} parent=1 // loop_pre_header
      _
    $region3: #{tpu_custom_call.1} parent=1 // loop_header
      %s19 = sphi 0, %s23
      %p20 = scmp.ge.s32.totalorder %s19, 5
      %s29 = sphi 0, %s31
      %s32 = sphi 0, %s29
      %s33 = sphi 0, %s32
      %s49 = sphi 0, %s33
      %s53 = sphi 0, %s53
      %s55 = sphi 0, %s53
      %s56 = sphi 0, %s55
      %s70 = sphi 0, %s56
      %s76 = sphi 0, %s78
      %s79 = sphi 0, %s76
      %s80 = sphi 0, %s79
      %s96 = sphi 0, %s80
    $region4: #{tpu_custom_call.1} parent=1 // loop_header_branch
      %22 = sbr.rel (%p20) target = $region8
    $region5: #{tpu_custom_call.1} parent=1 // loop_body
      %s24 = ssub.s32 %s19, 1
      %s25 = ssub.s32 %s19, 2
      %s26 = sadd.s32 %s19, 1
      %s27 = ssub.s32 %s19, %s26
      %p28 = scmp.eq.s32.totalorder %s27, 0
      %s30 = sadd.s32 %s29, 1
      %s31 = scalar_select %p28, %s29, %s30
      %p34 = pneg %p28
      %p35 = scmp.eq.s32.totalorder %s19, 2
      %p36 = por %p34, %p35
      %p37 = scmp.ne.s32.totalorder %s29, %s32
      %p38 = scmp.eq.s32.totalorder %s19, 0
      %p39 = por %p37, %p38
      %p40 = scmp.ne.s32.totalorder %s29, %s32
      %p41 = scmp.eq.s32.totalorder %s24, 2
      %p42 = por %p40, %p41
      %p43 = scmp.ne.s32.totalorder %s32, %s33
      %p44 = scmp.eq.s32.totalorder %s24, 0
      %p45 = por %p43, %p44
      %p46 = scmp.ne.s32.totalorder %s32, %s33
      %p47 = scmp.eq.s32.totalorder %s25, 2
      %p48 = por %p46, %p47
      %p50 = scmp.ne.s32.totalorder %s33, %s49
      %p51 = scmp.eq.s32.totalorder %s25, 0
      %p52 = por %p50, %p51
      %s54 = sadd.s32 %s53, 1
      %p57 = scmp.eq.s32.totalorder %s19, 2
      %p58 = scmp.ne.s32.totalorder %s53, %s55
      %p59 = scmp.eq.s32.totalorder %s19, 0
      %p60 = por %p58, %p59
      %p61 = scmp.ne.s32.totalorder %s53, %s55
      %p62 = scmp.eq.s32.totalorder %s24, 2
      %p63 = por %p61, %p62
      %p64 = scmp.ne.s32.totalorder %s55, %s56
      %p65 = scmp.eq.s32.totalorder %s24, 0
      %p66 = por %p64, %p65
      %p67 = scmp.ne.s32.totalorder %s55, %s56
      %p68 = scmp.eq.s32.totalorder %s25, 2
      %p69 = por %p67, %p68
      %p71 = scmp.ne.s32.totalorder %s56, %s70
      %p72 = scmp.eq.s32.totalorder %s25, 0
      %p73 = por %p71, %p72
      %s74 = ssub.s32 %s19, %s26
      %p75 = scmp.eq.s32.totalorder %s74, 0
      %s77 = sadd.s32 %s76, 1
      %s78 = scalar_select %p75, %s76, %s77
      %p81 = pneg %p75
      %p82 = scmp.eq.s32.totalorder %s19, 2
      %p83 = por %p81, %p82
      %p84 = scmp.ne.s32.totalorder %s76, %s79
      %p85 = scmp.eq.s32.totalorder %s19, 0
      %p86 = por %p84, %p85
      %p87 = scmp.ne.s32.totalorder %s76, %s79
      %p88 = scmp.eq.s32.totalorder %s24, 2
      %p89 = por %p87, %p88
      %p90 = scmp.ne.s32.totalorder %s79, %s80
      %p91 = scmp.eq.s32.totalorder %s24, 0
      %p92 = por %p90, %p91
      %p93 = scmp.ne.s32.totalorder %s79, %s80
      %p94 = scmp.eq.s32.totalorder %s25, 2
      %p95 = por %p93, %p94
      %p97 = scmp.ne.s32.totalorder %s80, %s96
      %p98 = scmp.eq.s32.totalorder %s25, 0
      %p99 = por %p97, %p98
      %p100 = scmp.le.s32.totalorder 1, %s19
      %p101 = scmp.lt.s32.totalorder %s19, 4
      %p102 = pnand %p100, %p101
      %p103 = pneg %p102
      // Predicated region
      $region9: #{tpu_custom_call.1} parent=5 // pred_check
        _
      $region10: #{tpu_custom_call.1} parent=5 // pred_check_branch
        %105 = sbr.rel (%p102) target = $region12
      $region11: #{tpu_custom_call.1} parent=5 // pred_region
        %s106 = ssub.s32 %s19, 1
        // Predicated region
        $region13: #{tpu_custom_call.1} parent=11 // pred_check
          %p107 = pneg %p66
        $region14: #{tpu_custom_call.1} parent=11 // pred_check_branch
          %109 = sbr.rel (%p107) target = $region16
        $region15: #{tpu_custom_call.1} parent=11 // pred_region
          _
        $region16: #{tpu_custom_call.1} parent=11 // pred_fallthru
          _
      $region12: #{tpu_custom_call.1} parent=5 // pred_fallthru
        _
      %p110 = scmp.lt.s32.totalorder %s19, 3
      // Predicated region
      $region17: #{tpu_custom_call.1} parent=5 // pred_check
        %p111 = pneg %p110
      $region18: #{tpu_custom_call.1} parent=5 // pred_check_branch
        %113 = sbr.rel (%p111) target = $region20
      $region19: #{tpu_custom_call.1} parent=5 // pred_region
        // Predicated region
        $region21: #{tpu_custom_call.1} parent=19 // pred_check
          %p114 = pneg %p39
        $region22: #{tpu_custom_call.1} parent=19 // pred_check_branch
          %116 = sbr.rel (%p114) target = $region24
        $region23: #{tpu_custom_call.1} parent=19 // pred_region
          %s117 = smul.u32 4, %s19
          %p118 = scmp.lt.s32.totalorder %s117, 11
          %s119 = scalar_select %p118, %s117, 11
          %s120 = smul.addr %s119, 8
          %s121 = scalar_lea.vmem %s2, %s120
          %s122 = smul.u32 4, %s19
        $region24: #{tpu_custom_call.1} parent=19 // pred_fallthru
          _
      $region20: #{tpu_custom_call.1} parent=5 // pred_fallthru
        _
      %p123 = scmp.le.s32.totalorder 1, %s19
      %p124 = scmp.lt.s32.totalorder %s19, 4
      %p125 = pnand %p123, %p124
      %p126 = pneg %p125
      // Predicated region
      $region25: #{tpu_custom_call.1} parent=5 // pred_check
        _
      $region26: #{tpu_custom_call.1} parent=5 // pred_check_branch
        %128 = sbr.rel (%p125) target = $region28
      $region27: #{tpu_custom_call.1} parent=5 // pred_region
        %s129 = ssub.s32 %s19, 1
        %s130 = smul.u32 4, %s24
        %p131 = scmp.lt.s32.totalorder %s130, 11
        %s132 = scalar_select %p131, %s130, 11
        %s133 = smul.addr %s132, 8
        %s134 = scalar_lea.vmem %s2, %s133
        %p135 = pneg %p45
        %p136 = pneg %p42
        %p137 = pneg %p66
        %p138 = pneg %p63
        %p139 = pneg %p92
        %p140 = pneg %p89
        %s141 = sand.u32 %s79, 1
        %s142 = scalar_lea.sflag [#allocation7], %s141
        %s143 = sand.u32 %s79, 1
        %s144 = smul.addr %s143, 32
        %s145 = scalar_lea.vmem [#allocation6], %s144
        %s146 = smul.u32 4, %s24
        %p147 = scmp.lt.s32.totalorder %s146, 11
        %s148 = scalar_select %p147, %s146, 11
        %s149 = smul.addr %s148, 8
        %s150 = scalar_lea.vmem %s2, %s149
        %s151 = smul.u32 4, %s24
        %s152 = smul.u32 4, %s24
        %p153 = scmp.eq.s32.totalorder %s24, 0
        // Predicated region
        $region29: #{tpu_custom_call.1} parent=27 // pred_check
          %p154 = pneg %p153
        $region30: #{tpu_custom_call.1} parent=27 // pred_check_branch
          %156 = sbr.rel (%p154) target = $region32
        $region31: #{tpu_custom_call.1} parent=27 // pred_region
          loop: start=0, step=1, limit=4
          $region33: #{tpu_custom_call.1} parent=31 // loop_pre_header
            _
          $region34: #{tpu_custom_call.1} parent=31 // loop_header
            %s158 = sphi 0, %s162
            %p159 = scmp.ge.s32.totalorder %s158, 4
          $region35: #{tpu_custom_call.1} parent=31 // loop_header_branch
            %161 = sbr.rel (%p159) target = $region39
          $region36: #{tpu_custom_call.1} parent=31 // loop_body
            %s163 = smul.u32 %s158, 8
            %s164 = sld [smem:[#allocation5 + %s163]]
            %s165 = smul.addr %s164, 16
            %s166 = scalar_lea.hbm %s1, %s165
            %s167 = scalar_lea.vmem [#allocation2], %s163
            // Predicated region
            $region40: #{tpu_custom_call.1} parent=36 // pred_check
              _
            $region41: #{tpu_custom_call.1} parent=36 // pred_check_branch
              %169 = sbr.rel target = $region43
            $region42: #{tpu_custom_call.1} parent=36 // pred_region
              %170 = sst [smem:[#allocation10]] [#allocation9]
              %171 = sst [smem:[#allocation11]] [#allocation8]
            $region43: #{tpu_custom_call.1} parent=36 // pred_fallthru
              _
            %173 = shalt.err (0)
            %s175 = sshll.u32 %s167, 4
            %s176 = int_to_ptr.vmem [resolvable:$true] %s175
            %178 = dma.hbm_to_vmem [thread:$0]  %s166, 16, %s176, [#allocation3]
            %s179 = sadd.s32 %s163, 1
            %s180 = sld [smem:[#allocation5 + %s179]]
            %s181 = smul.addr %s180, 16
            %s182 = scalar_lea.hbm %s1, %s181
            %s183 = scalar_lea.vmem [#allocation2], %s179
            // Predicated region
            $region44: #{tpu_custom_call.1} parent=36 // pred_check
              _
            $region45: #{tpu_custom_call.1} parent=36 // pred_check_branch
              %185 = sbr.rel target = $region47
            $region46: #{tpu_custom_call.1} parent=36 // pred_region
              %186 = sst [smem:[#allocation10]] [#allocation13]
              %187 = sst [smem:[#allocation11]] [#allocation12]
            $region47: #{tpu_custom_call.1} parent=36 // pred_fallthru
              _
            %189 = shalt.err (0)
            %s191 = sshll.u32 %s183, 4
            %s192 = int_to_ptr.vmem [resolvable:$true] %s191
            %194 = dma.hbm_to_vmem [thread:$0]  %s182, 16, %s192, [#allocation3]
            %s195 = sadd.s32 %s163, 2
            %s196 = sld [smem:[#allocation5 + %s195]]
            %s197 = smul.addr %s196, 16
            %s198 = scalar_lea.hbm %s1, %s197
            %s199 = scalar_lea.vmem [#allocation2], %s195
            // Predicated region
            $region48: #{tpu_custom_call.1} parent=36 // pred_check
              _
            $region49: #{tpu_custom_call.1} parent=36 // pred_check_branch
              %201 = sbr.rel target = $region51
            $region50: #{tpu_custom_call.1} parent=36 // pred_region
              %202 = sst [smem:[#allocation10]] [#allocation15]
              %203 = sst [smem:[#allocation11]] [#allocation14]
            $region51: #{tpu_custom_call.1} parent=36 // pred_fallthru
              _
            %205 = shalt.err (0)
            %s207 = sshll.u32 %s199, 4
            %s208 = int_to_ptr.vmem [resolvable:$true] %s207
            %210 = dma.hbm_to_vmem [thread:$0]  %s198, 16, %s208, [#allocation3]
            %s211 = sadd.s32 %s163, 3
            %s212 = sld [smem:[#allocation5 + %s211]]
            %s213 = smul.addr %s212, 16
            %s214 = scalar_lea.hbm %s1, %s213
            %s215 = scalar_lea.vmem [#allocation2], %s211
            // Predicated region
            $region52: #{tpu_custom_call.1} parent=36 // pred_check
              _
            $region53: #{tpu_custom_call.1} parent=36 // pred_check_branch
              %217 = sbr.rel target = $region55
            $region54: #{tpu_custom_call.1} parent=36 // pred_region
              %218 = sst [smem:[#allocation10]] [#allocation17]
              %219 = sst [smem:[#allocation11]] [#allocation16]
            $region55: #{tpu_custom_call.1} parent=36 // pred_fallthru
              _
            %221 = shalt.err (0)
            %s223 = sshll.u32 %s215, 4
            %s224 = int_to_ptr.vmem [resolvable:$true] %s223
            %226 = dma.hbm_to_vmem [thread:$0]  %s214, 16, %s224, [#allocation3]
            %s227 = sadd.s32 %s163, 4
            %s228 = sld [smem:[#allocation5 + %s227]]
            %s229 = smul.addr %s228, 16
            %s230 = scalar_lea.hbm %s1, %s229
            %s231 = scalar_lea.vmem [#allocation2], %s227
            // Predicated region
            $region56: #{tpu_custom_call.1} parent=36 // pred_check
              _
            $region57: #{tpu_custom_call.1} parent=36 // pred_check_branch
              %233 = sbr.rel target = $region59
            $region58: #{tpu_custom_call.1} parent=36 // pred_region
              %234 = sst [smem:[#allocation10]] [#allocation19]
              %235 = sst [smem:[#allocation11]] [#allocation18]
            $region59: #{tpu_custom_call.1} parent=36 // pred_fallthru
              _
            %237 = shalt.err (0)
            %s239 = sshll.u32 %s231, 4
            %s240 = int_to_ptr.vmem [resolvable:$true] %s239
            %242 = dma.hbm_to_vmem [thread:$0]  %s230, 16, %s240, [#allocation3]
            %s243 = sadd.s32 %s163, 5
            %s244 = sld [smem:[#allocation5 + %s243]]
            %s245 = smul.addr %s244, 16
            %s246 = scalar_lea.hbm %s1, %s245
            %s247 = scalar_lea.vmem [#allocation2], %s243
            // Predicated region
            $region60: #{tpu_custom_call.1} parent=36 // pred_check
              _
            $region61: #{tpu_custom_call.1} parent=36 // pred_check_branch
              %249 = sbr.rel target = $region63
            $region62: #{tpu_custom_call.1} parent=36 // pred_region
              %250 = sst [smem:[#allocation10]] [#allocation21]
              %251 = sst [smem:[#allocation11]] [#allocation20]
            $region63: #{tpu_custom_call.1} parent=36 // pred_fallthru
              _
            %253 = shalt.err (0)
            %s255 = sshll.u32 %s247, 4
            %s256 = int_to_ptr.vmem [resolvable:$true] %s255
            %258 = dma.hbm_to_vmem [thread:$0]  %s246, 16, %s256, [#allocation3]
            %s259 = sadd.s32 %s163, 6
            %s260 = sld [smem:[#allocation5 + %s259]]
            %s261 = smul.addr %s260, 16
            %s262 = scalar_lea.hbm %s1, %s261
            %s263 = scalar_lea.vmem [#allocation2], %s259
            // Predicated region
            $region64: #{tpu_custom_call.1} parent=36 // pred_check
              _
            $region65: #{tpu_custom_call.1} parent=36 // pred_check_branch
              %265 = sbr.rel target = $region67
            $region66: #{tpu_custom_call.1} parent=36 // pred_region
              %266 = sst [smem:[#allocation10]] [#allocation23]
              %267 = sst [smem:[#allocation11]] [#allocation22]
            $region67: #{tpu_custom_call.1} parent=36 // pred_fallthru
              _
            %269 = shalt.err (0)
            %s271 = sshll.u32 %s263, 4
            %s272 = int_to_ptr.vmem [resolvable:$true] %s271
            %274 = dma.hbm_to_vmem [thread:$0]  %s262, 16, %s272, [#allocation3]
            %s275 = sadd.s32 %s163, 7
            %s276 = sld [smem:[#allocation5 + %s275]]
            %s277 = smul.addr %s276, 16
            %s278 = scalar_lea.hbm %s1, %s277
            %s279 = scalar_lea.vmem [#allocation2], %s275
            // Predicated region
            $region68: #{tpu_custom_call.1} parent=36 // pred_check
              _
            $region69: #{tpu_custom_call.1} parent=36 // pred_check_branch
              %281 = sbr.rel target = $region71
            $region70: #{tpu_custom_call.1} parent=36 // pred_region
              %282 = sst [smem:[#allocation10]] [#allocation25]
              %283 = sst [smem:[#allocation11]] [#allocation24]
            $region71: #{tpu_custom_call.1} parent=36 // pred_fallthru
              _
            %285 = shalt.err (0)
            %s287 = sshll.u32 %s279, 4
            %s288 = int_to_ptr.vmem [resolvable:$true] %s287
            %290 = dma.hbm_to_vmem [thread:$0]  %s278, 16, %s288, [#allocation3]
          $region37: #{tpu_custom_call.1} parent=31 // loop_footer
            %s162 = sadd.s32 1, %s158
          $region38: #{tpu_custom_call.1} parent=31 // loop_footer_branch
            %157 = sbr.rel target = $region34
          $region39: #{tpu_custom_call.1} parent=31 // loop_exit
            _
        $region32: #{tpu_custom_call.1} parent=27 // pred_fallthru
          _
        %s291 = sadd.s32 %s24, 1
        %p292 = scmp.lt.s32.totalorder %s291, 3
        // Predicated region
        $region72: #{tpu_custom_call.1} parent=27 // pred_check
          %p293 = pneg %p292
        $region73: #{tpu_custom_call.1} parent=27 // pred_check_branch
          %295 = sbr.rel (%p293) target = $region75
        $region74: #{tpu_custom_call.1} parent=27 // pred_region
          %p296 = scmp.lt.s32.totalorder %s291, 0
          %s297 = ssub.s32 0, %s291
          %s298 = scalar_select %p296, %s297, %s291
          %s299 = sand.u32 %s298, 1
          %s300 = ssub.s32 0, %s299
          %s301 = scalar_select %p296, %s300, %s299
          %p302 = scmp.ne.s32.totalorder %s301, 0
          %p303 = scmp.lt.s32.totalorder %s301, 0
          %p304 = pnand %p303, %p302
          %p305 = pneg %p304
          %s306 = sadd.s32 %s301, 2
          %s307 = scalar_select %p305, %s306, %s301
          %s308 = smul.u32 %s291, 32
          %s309 = smul.u32 %s307, 32
          loop: start=0, step=1, limit=4
          $region76: #{tpu_custom_call.1} parent=74 // loop_pre_header
            _
          $region77: #{tpu_custom_call.1} parent=74 // loop_header
            %s311 = sphi 0, %s315
            %p312 = scmp.ge.s32.totalorder %s311, 4
          $region78: #{tpu_custom_call.1} parent=74 // loop_header_branch
            %314 = sbr.rel (%p312) target = $region82
          $region79: #{tpu_custom_call.1} parent=74 // loop_body
            %s316 = smul.u32 %s311, 8
            %s317 = sadd.s32 %s308, %s316
            %s318 = sld [smem:[#allocation5 + %s317]]
            %s319 = sadd.s32 %s309, %s316
            %s320 = smul.addr %s318, 16
            %s321 = scalar_lea.hbm %s1, %s320
            %s322 = scalar_lea.vmem [#allocation2], %s319
            %s323 = scalar_lea.sflag [#allocation3], %s307
            // Predicated region
            $region83: #{tpu_custom_call.1} parent=79 // pred_check
              _
            $region84: #{tpu_custom_call.1} parent=79 // pred_check_branch
              %325 = sbr.rel target = $region86
            $region85: #{tpu_custom_call.1} parent=79 // pred_region
              %326 = sst [smem:[#allocation10]] [#allocation27]
              %327 = sst [smem:[#allocation11]] [#allocation26]
            $region86: #{tpu_custom_call.1} parent=79 // pred_fallthru
              _
            %329 = shalt.err (0)
            %s331 = sshll.u32 %s322, 4
            %s332 = int_to_ptr.vmem [resolvable:$true] %s331
            %334 = dma.hbm_to_vmem [thread:$0]  %s321, 16, %s332, %s323
            %s335 = sadd.s32 %s316, 1
            %s336 = sadd.s32 %s308, %s335
            %s337 = sld [smem:[#allocation5 + %s336]]
            %s338 = sadd.s32 %s309, %s335
            %s339 = smul.addr %s337, 16
            %s340 = scalar_lea.hbm %s1, %s339
            %s341 = scalar_lea.vmem [#allocation2], %s338
            // Predicated region
            $region87: #{tpu_custom_call.1} parent=79 // pred_check
              _
            $region88: #{tpu_custom_call.1} parent=79 // pred_check_branch
              %343 = sbr.rel target = $region90
            $region89: #{tpu_custom_call.1} parent=79 // pred_region
              %344 = sst [smem:[#allocation10]] [#allocation29]
              %345 = sst [smem:[#allocation11]] [#allocation28]
            $region90: #{tpu_custom_call.1} parent=79 // pred_fallthru
              _
            %347 = shalt.err (0)
            %s349 = sshll.u32 %s341, 4
            %s350 = int_to_ptr.vmem [resolvable:$true] %s349
            %352 = dma.hbm_to_vmem [thread:$0]  %s340, 16, %s350, %s323
            %s353 = sadd.s32 %s316, 2
            %s354 = sadd.s32 %s308, %s353
            %s355 = sld [smem:[#allocation5 + %s354]]
            %s356 = sadd.s32 %s309, %s353
            %s357 = smul.addr %s355, 16
            %s358 = scalar_lea.hbm %s1, %s357
            %s359 = scalar_lea.vmem [#allocation2], %s356
            // Predicated region
            $region91: #{tpu_custom_call.1} parent=79 // pred_check
              _
            $region92: #{tpu_custom_call.1} parent=79 // pred_check_branch
              %361 = sbr.rel target = $region94
            $region93: #{tpu_custom_call.1} parent=79 // pred_region
              %362 = sst [smem:[#allocation10]] [#allocation31]
              %363 = sst [smem:[#allocation11]] [#allocation30]
            $region94: #{tpu_custom_call.1} parent=79 // pred_fallthru
              _
            %365 = shalt.err (0)
            %s367 = sshll.u32 %s359, 4
            %s368 = int_to_ptr.vmem [resolvable:$true] %s367
            %370 = dma.hbm_to_vmem [thread:$0]  %s358, 16, %s368, %s323
            %s371 = sadd.s32 %s316, 3
            %s372 = sadd.s32 %s308, %s371
            %s373 = sld [smem:[#allocation5 + %s372]]
            %s374 = sadd.s32 %s309, %s371
            %s375 = smul.addr %s373, 16
            %s376 = scalar_lea.hbm %s1, %s375
            %s377 = scalar_lea.vmem [#allocation2], %s374
            // Predicated region
            $region95: #{tpu_custom_call.1} parent=79 // pred_check
              _
            $region96: #{tpu_custom_call.1} parent=79 // pred_check_branch
              %379 = sbr.rel target = $region98
            $region97: #{tpu_custom_call.1} parent=79 // pred_region
              %380 = sst [smem:[#allocation10]] [#allocation33]
              %381 = sst [smem:[#allocation11]] [#allocation32]
            $region98: #{tpu_custom_call.1} parent=79 // pred_fallthru
              _
            %383 = shalt.err (0)
            %s385 = sshll.u32 %s377, 4
            %s386 = int_to_ptr.vmem [resolvable:$true] %s385
            %388 = dma.hbm_to_vmem [thread:$0]  %s376, 16, %s386, %s323
            %s389 = sadd.s32 %s316, 4
            %s390 = sadd.s32 %s308, %s389
            %s391 = sld [smem:[#allocation5 + %s390]]
            %s392 = sadd.s32 %s309, %s389
            %s393 = smul.addr %s391, 16
            %s394 = scalar_lea.hbm %s1, %s393
            %s395 = scalar_lea.vmem [#allocation2], %s392
            // Predicated region
            $region99: #{tpu_custom_call.1} parent=79 // pred_check
              _
            $region100: #{tpu_custom_call.1} parent=79 // pred_check_branch
              %397 = sbr.rel target = $region102
            $region101: #{tpu_custom_call.1} parent=79 // pred_region
              %398 = sst [smem:[#allocation10]] [#allocation35]
              %399 = sst [smem:[#allocation11]] [#allocation34]
            $region102: #{tpu_custom_call.1} parent=79 // pred_fallthru
              _
            %401 = shalt.err (0)
            %s403 = sshll.u32 %s395, 4
            %s404 = int_to_ptr.vmem [resolvable:$true] %s403
            %406 = dma.hbm_to_vmem [thread:$0]  %s394, 16, %s404, %s323
            %s407 = sadd.s32 %s316, 5
            %s408 = sadd.s32 %s308, %s407
            %s409 = sld [smem:[#allocation5 + %s408]]
            %s410 = sadd.s32 %s309, %s407
            %s411 = smul.addr %s409, 16
            %s412 = scalar_lea.hbm %s1, %s411
            %s413 = scalar_lea.vmem [#allocation2], %s410
            // Predicated region
            $region103: #{tpu_custom_call.1} parent=79 // pred_check
              _
            $region104: #{tpu_custom_call.1} parent=79 // pred_check_branch
              %415 = sbr.rel target = $region106
            $region105: #{tpu_custom_call.1} parent=79 // pred_region
              %416 = sst [smem:[#allocation10]] [#allocation37]
              %417 = sst [smem:[#allocation11]] [#allocation36]
            $region106: #{tpu_custom_call.1} parent=79 // pred_fallthru
              _
            %419 = shalt.err (0)
            %s421 = sshll.u32 %s413, 4
            %s422 = int_to_ptr.vmem [resolvable:$true] %s421
            %424 = dma.hbm_to_vmem [thread:$0]  %s412, 16, %s422, %s323
            %s425 = sadd.s32 %s316, 6
            %s426 = sadd.s32 %s308, %s425
            %s427 = sld [smem:[#allocation5 + %s426]]
            %s428 = sadd.s32 %s309, %s425
            %s429 = smul.addr %s427, 16
            %s430 = scalar_lea.hbm %s1, %s429
            %s431 = scalar_lea.vmem [#allocation2], %s428
            // Predicated region
            $region107: #{tpu_custom_call.1} parent=79 // pred_check
              _
            $region108: #{tpu_custom_call.1} parent=79 // pred_check_branch
              %433 = sbr.rel target = $region110
            $region109: #{tpu_custom_call.1} parent=79 // pred_region
              %434 = sst [smem:[#allocation10]] [#allocation39]
              %435 = sst [smem:[#allocation11]] [#allocation38]
            $region110: #{tpu_custom_call.1} parent=79 // pred_fallthru
              _
            %437 = shalt.err (0)
            %s439 = sshll.u32 %s431, 4
            %s440 = int_to_ptr.vmem [resolvable:$true] %s439
            %442 = dma.hbm_to_vmem [thread:$0]  %s430, 16, %s440, %s323
            %s443 = sadd.s32 %s316, 7
            %s444 = sadd.s32 %s308, %s443
            %s445 = sld [smem:[#allocation5 + %s444]]
            %s446 = sadd.s32 %s309, %s443
            %s447 = smul.addr %s445, 16
            %s448 = scalar_lea.hbm %s1, %s447
            %s449 = scalar_lea.vmem [#allocation2], %s446
            // Predicated region
            $region111: #{tpu_custom_call.1} parent=79 // pred_check
              _
            $region112: #{tpu_custom_call.1} parent=79 // pred_check_branch
              %451 = sbr.rel target = $region114
            $region113: #{tpu_custom_call.1} parent=79 // pred_region
              %452 = sst [smem:[#allocation10]] [#allocation41]
              %453 = sst [smem:[#allocation11]] [#allocation40]
            $region114: #{tpu_custom_call.1} parent=79 // pred_fallthru
              _
            %455 = shalt.err (0)
            %s457 = sshll.u32 %s449, 4
            %s458 = int_to_ptr.vmem [resolvable:$true] %s457
            %460 = dma.hbm_to_vmem [thread:$0]  %s448, 16, %s458, %s323
          $region80: #{tpu_custom_call.1} parent=74 // loop_footer
            %s315 = sadd.s32 1, %s311
          $region81: #{tpu_custom_call.1} parent=74 // loop_footer_branch
            %310 = sbr.rel target = $region77
          $region82: #{tpu_custom_call.1} parent=74 // loop_exit
            _
        $region75: #{tpu_custom_call.1} parent=27 // pred_fallthru
          _
        %p461 = scmp.lt.s32.totalorder %s24, 0
        %s462 = ssub.s32 0, %s24
        %s463 = scalar_select %p461, %s462, %s24
        %s464 = sand.u32 %s463, 1
        %s465 = ssub.s32 0, %s464
        %s466 = scalar_select %p461, %s465, %s464
        %p467 = scmp.ne.s32.totalorder %s466, 0
        %p468 = scmp.lt.s32.totalorder %s466, 0
        %p469 = pnand %p468, %p467
        %p470 = pneg %p469
        %s471 = sadd.s32 %s466, 2
        %s472 = scalar_select %p470, %s471, %s466
        %s473 = smul.u32 %s472, 32
        %s474 = scalar_lea.vmem [#allocation2], %s473
        %s475 = scalar_lea.sflag [#allocation3], %s472
        %s476 = smul.u32 32, 1
        %s477 = sshll.u32 %s476, 4
        %478 = dma.done %s475, %s477
        %v479 = vld [vmem:[%s150] sm:$0xff]
        %v480 = vld [vmem:[%s150 + $0x8] sm:$0xff]
        %v481 = vld [vmem:[%s150 + $0x10] sm:$0xff]
        %v482 = vld [vmem:[%s150 + $0x18] sm:$0xff]
        %v483 = vld [vmem:[%s3] sm:$0xff]
        %vm484 = vcmask 64512
        %v486 = vsel %vm484, %v479, 0
        %v489 = vsel %vm484, %v480, 0
        %v492 = vsel %vm484, %v481, 0
        %v495 = vsel %vm484, %v482, 0
        %497 = vmatprep.subr.mxu0 0.0
        %498 = vmatpush1.msra.mxu0 0.0
        %499 = vmatprep.subr.mxu0 0.0
        %500 = vmatpush1.msra.mxu0 0.0
        %501 = vmatprep.subr.mxu0 0.0
        %502 = vmatpush1.msra.mxu0 0.0
        %503 = vmatprep.subr.mxu0 0.0
        %504 = vmatpush1.msra.mxu0 0.0
        %505 = vmatprep.subr.mxu0 0.0
        %506 = vmatpush1.msra.mxu0 0.0
        %507 = vmatprep.subr.mxu0 0.0
        %508 = vmatpush1.msra.mxu0 0.0
        %509 = vmatprep.subr.mxu0 0.0
        %510 = vmatpush1.msra.mxu0 0.0
        %511 = vmatprep.subr.mxu0 0.0
        %512 = vmatpush1.msra.mxu0 0.0
        %513 = vmatprep.subr.mxu0 0.0
        %514 = vmatpush1.msra.mxu0 0.0
        %515 = vmatprep.subr.mxu0 0.0
        %516 = vmatpush1.msra.mxu0 0.0
        %517 = vmatprep.subr.mxu0 0.0
        %518 = vmatpush1.msra.mxu0 0.0
        %519 = vmatprep.subr.mxu0 0.0
        %520 = vmatpush1.msra.mxu0 0.0
        %521 = vmatprep.subr.mxu0 0.0
        %522 = vmatpush1.msra.mxu0 0.0
        %523 = vmatprep.subr.mxu0 0.0
        %524 = vmatpush1.msra.mxu0 0.0
        %525 = vmatprep.subr.mxu0 0.0
        %526 = vmatpush1.msra.mxu0 0.0
        %527 = vmatprep.subr.mxu0 0.0
        %528 = vmatpush1.msra.mxu0 %v483
        %529 = vmatprep.subr.mxu0 0.0
        %530 = vmatpush2.msra.mxu0 0.0
        %531 = vmatprep.subr.mxu0 0.0
        %532 = vmatpush2.msra.mxu0 0.0
        %533 = vmatprep.subr.mxu0 0.0
        %534 = vmatpush2.msra.mxu0 0.0
        %535 = vmatprep.subr.mxu0 0.0
        %536 = vmatpush2.msra.mxu0 0.0
        %537 = vmatprep.subr.mxu0 0.0
        %538 = vmatpush2.msra.mxu0 0.0
        %539 = vmatprep.subr.mxu0 0.0
        %540 = vmatpush2.msra.mxu0 0.0
        %541 = vmatprep.subr.mxu0 0.0
        %542 = vmatpush2.msra.mxu0 0.0
        %543 = vmatprep.subr.mxu0 0.0
        %544 = vmatpush2.msra.mxu0 0.0
        %545 = vmatprep.subr.mxu0 0.0
        %546 = vmatpush2.msra.mxu0 0.0
        %547 = vmatprep.subr.mxu0 0.0
        %548 = vmatpush2.msra.mxu0 0.0
        %549 = vmatprep.subr.mxu0 0.0
        %550 = vmatpush2.msra.mxu0 0.0
        %551 = vmatprep.subr.mxu0 0.0
        %552 = vmatpush2.msra.mxu0 0.0
        %553 = vmatprep.subr.mxu0 0.0
        %554 = vmatpush2.msra.mxu0 0.0
        %555 = vmatprep.subr.mxu0 0.0
        %556 = vmatpush2.msra.mxu0 0.0
        %557 = vmatprep.subr.mxu0 0.0
        %558 = vmatpush2.msra.mxu0 0.0
        %559 = vmatprep.subr.mxu0 0.0
        %560 = vmatpush2.msra.mxu0 0.0
        %561 = vmatprep.mubr.f32.mxu0 0.0
        %562 = vmatmul.mubr.f32.gmra.mxu0 %v486
        %v563 = vpop.f32.mrf.mxu0
        %v564 = vadd.f32 0.0, %v563
        %v565 = vpop.f32.mrf.mxu0
        %566 = vmatprep.mubr.f32.mxu0 0.0
        %567 = vmatmul.mubr.f32.gmra.mxu0 %v489
        %v568 = vpop.f32.mrf.mxu0
        %v569 = vadd.f32 0.0, %v568
        %v570 = vpop.f32.mrf.mxu0
        %571 = vmatprep.mubr.f32.mxu0 0.0
        %572 = vmatmul.mubr.f32.gmra.mxu0 %v492
        %v573 = vpop.f32.mrf.mxu0
        %v574 = vadd.f32 0.0, %v573
        %v575 = vpop.f32.mrf.mxu0
        %576 = vmatprep.mubr.f32.mxu0 0.0
        %577 = vmatmul.mubr.f32.gmra.mxu0 %v495
        %v578 = vpop.f32.mrf.mxu0
        %v579 = vadd.f32 0.0, %v578
        %v580 = vpop.f32.mrf.mxu0
        %581 = vdwg.mxu0
        %v582 = vld [vmem:[%s474] sm:$0xff]
        %v583 = vld [vmem:[%s474 + $0x8] sm:$0xff]
        %v584 = vld [vmem:[%s474 + $0x10] sm:$0xff]
        %v585 = vld [vmem:[%s474 + $0x18] sm:$0xff]
        %v586 = vadd.f32 %v582, %v564
        %v587 = vadd.f32 %v583, %v569
        %v588 = vadd.f32 %v584, %v574
        %v589 = vadd.f32 %v585, %v579
        %590 = vst [vmem:[%s145] sm:$0xff] %v586
        %591 = vst [vmem:[%s145 + $0x8] sm:$0xff] %v587
        %592 = vst [vmem:[%s145 + $0x10] sm:$0xff] %v588
        %593 = vst [vmem:[%s145 + $0x18] sm:$0xff] %v589
        %s594 = sand.u32 %s79, 1
        %s595 = scalar_lea.sflag [#allocation7], %s594
        %s596 = sand.u32 %s79, 1
        %s597 = smul.addr %s596, 32
        %s598 = scalar_lea.vmem [#allocation6], %s597
        // Predicated region
        $region115: #{tpu_custom_call.1} parent=27 // pred_check
          %p599 = pneg %p89
        $region116: #{tpu_custom_call.1} parent=27 // pred_check_branch
          %601 = sbr.rel (%p599) target = $region118
        $region117: #{tpu_custom_call.1} parent=27 // pred_region
          %s602 = smul.u32 4, %s24
          %s604 = ssub.s32 512, 512
          %605 = vsyncadd %s595, %s604
          %s606 = smul.addr %s602, 128
          %s607 = scalar_lea.hbm %s4, %s606
          %s608 = sshll.u32 %s598, 4
          %s609 = int_to_ptr.vmem [resolvable:$true] %s608
          %614 = dma.vmem_to_hbm [thread:$0]  %s609, 512, %s607, %s595, 128, 128, 8
        $region118: #{tpu_custom_call.1} parent=27 // pred_fallthru
          _
      $region28: #{tpu_custom_call.1} parent=5 // pred_fallthru
        _
      %p615 = scmp.le.s32.totalorder 2, %s19
      // Predicated region
      $region119: #{tpu_custom_call.1} parent=5 // pred_check
        %p616 = pneg %p615
      $region120: #{tpu_custom_call.1} parent=5 // pred_check_branch
        %618 = sbr.rel (%p616) target = $region122
      $region121: #{tpu_custom_call.1} parent=5 // pred_region
        %s619 = ssub.s32 %s19, 2
        // Predicated region
        $region123: #{tpu_custom_call.1} parent=121 // pred_check
          %p620 = pneg %p95
        $region124: #{tpu_custom_call.1} parent=121 // pred_check_branch
          %622 = sbr.rel (%p620) target = $region126
        $region125: #{tpu_custom_call.1} parent=121 // pred_region
          %s623 = sand.u32 %s80, 1
          %s624 = scalar_lea.sflag [#allocation7], %s623
          %s625 = sand.u32 %s80, 1
          %s626 = smul.addr %s625, 32
          %s627 = scalar_lea.vmem [#allocation6], %s626
          %628 = dma.done %s624, 512
        $region126: #{tpu_custom_call.1} parent=121 // pred_fallthru
          _
      $region122: #{tpu_custom_call.1} parent=5 // pred_fallthru
        _
    $region6: #{tpu_custom_call.1} parent=1 // loop_footer
      %s23 = sadd.s32 1, %s19
    $region7: #{tpu_custom_call.1} parent=1 // loop_footer_branch
      %18 = sbr.rel target = $region3
    $region8: #{tpu_custom_call.1} parent=1 // loop_exit
      _
    %629 = vsyncpa [#allocation7], 1
    %s630 = scalar_lea.sflag [#allocation7], 1
    %631 = vsyncpa %s630, 1
  %632 = vsyncmov [#allocation3]
  %s633 = vpop.sfrf %632
  %p634 = scmp.eq.s32.totalorder %s633, 0
  %p635 = pneg %p634
  %637 = shalt.err (%p635)
  %s638 = scalar_lea.sflag [#allocation3], 1
  %639 = vsyncmov %s638
  %s640 = vpop.sfrf %639
  %p641 = scmp.eq.s32.totalorder %s640, 0
  %p642 = pneg %p641
  %644 = shalt.err (%p642)

</llo_original>
